<compile_context>
chip_gen: v5e
topology: v5e:2x2
jax: 0.10.0
libtpu: 0.0.40
codegen_flags: <defaults>
</compile_context>

<pallas_src>
import functools
from typing import NamedTuple

import jax
import jax.numpy as jnp
from jax.experimental import pallas as pl
from jax.experimental.pallas import tpu as pltpu


class DecoderConfig(NamedTuple):
    output_dim: int
    emb_dim: int
    hid_dim: int
    n_layers: int


def _round_up(x, m):
    return ((x + m - 1) // m) * m


# ------------------------------ fused kernel --------------------------------


def _decoder_kernel(n_layers, hid_dim, tok_ref, emb_ref, h_in_ref, c_in_ref,
                    *rest):
    """Fused decoder forward.

    rest = 3*n_layers packed LSTM weight refs (wih_packed, whh_packed, bias),
    then out_w_ref, out_b_ref (inputs) and pred_ref, h_out_ref, c_out_ref
    (outputs).
    """
    H = hid_dim
    TH = 2 * H
    lw = rest[:3 * n_layers]
    out_w_ref, out_b_ref, pred_ref, h_out_ref, c_out_ref = rest[3 * n_layers:]

    # ---- embedding lookup as a one-hot matmul (table is VMEM-resident) ----
    tok = tok_ref[...]                                       # [B_pad, 1] int32
    b_pad = tok.shape[0]
    vocab_pad = emb_ref.shape[0]
    col = jax.lax.broadcasted_iota(jnp.int32, (b_pad, vocab_pad), 1)
    onehot = (col == tok).astype(jnp.float32)                # [B_pad, Vpad]
    x = jnp.dot(onehot, emb_ref[...],
                preferred_element_type=jnp.float32)          # [B_pad, E]
    # TODO(synk): nn.Dropout is stochastic in train mode; identity here (eval).

    h_all = h_in_ref[...]                                    # [B_pad, 2*L*H]
    c_all = c_in_ref[...]

    h_new_cols = []
    c_new_cols = []
    for layer in range(n_layers):
        wih_ref, whh_ref, b_ref = lw[3 * layer:3 * layer + 3]
        h_cat = h_all[:, layer * TH:(layer + 1) * TH]        # [B, 2H] fwd|bwd
        c_cat = c_all[:, layer * TH:(layer + 1) * TH]
        # Both directions in one pair of 256-lane-wide MXU matmuls.
        gates = (jnp.dot(x, wih_ref[...], preferred_element_type=jnp.float32)
                 + jnp.dot(h_cat, whh_ref[...],
                           preferred_element_type=jnp.float32)
                 + b_ref[...])                               # [B, 8H]
        i_g = jax.nn.sigmoid(gates[:, 0 * TH:1 * TH])
        f_g = jax.nn.sigmoid(gates[:, 1 * TH:2 * TH])
        g_g = jnp.tanh(gates[:, 2 * TH:3 * TH])
        o_g = jax.nn.sigmoid(gates[:, 3 * TH:4 * TH])
        c_new = f_g * c_cat + i_g * g_g                      # [B, 2H] fwd|bwd
        h_new = o_g * jnp.tanh(c_new)                        # [B, 2H] fwd|bwd
        h_new_cols.append(h_new)
        c_new_cols.append(c_new)
        # layer output = concat(fwd, bwd); inter-layer dropout = identity.
        x = h_new

    # ---- final projection (padded to a 128-lane-dense output) ----
    pred_ref[...] = (jnp.dot(x, out_w_ref[...],
                             preferred_element_type=jnp.float32)
                     + out_b_ref[...])
    h_out_ref[...] = jnp.concatenate(h_new_cols, axis=-1)
    c_out_ref[...] = jnp.concatenate(c_new_cols, axis=-1)


# --------------------------- parameter building -----------------------------


def init_decoder_params(key, cfg: DecoderConfig):
    """PyTorch-shaped raw parameters + packed/padded kernel operands."""
    O, E, H, L = cfg.output_dim, cfg.emb_dim, cfg.hid_dim, cfg.n_layers
    k = H ** -0.5
    keys = iter(jax.random.split(key, 1 + L * 2 * 4 + 2))

    emb = jax.random.normal(next(keys), (O, E), jnp.float32)

    raw_layers = []
    for layer in range(L):
        in_dim = E if layer == 0 else 2 * H
        dirs = []
        for _d in range(2):                      # forward, backward
            w_ih = jax.random.uniform(next(keys), (4 * H, in_dim),
                                      jnp.float32, -k, k)
            w_hh = jax.random.uniform(next(keys), (4 * H, H),
                                      jnp.float32, -k, k)
            b_ih = jax.random.uniform(next(keys), (4 * H,), jnp.float32, -k, k)
            b_hh = jax.random.uniform(next(keys), (4 * H,), jnp.float32, -k, k)
            dirs.append((w_ih, w_hh, b_ih, b_hh))
        raw_layers.append(dirs)

    out_w = jax.random.uniform(next(keys), (O, 2 * H), jnp.float32, -k, k)
    out_b = jax.random.uniform(next(keys), (O,), jnp.float32, -k, k)

    # ---- pack both directions per layer (layout plumbing, done once) ----
    def pack_layer(dirs):
        (wf, uf, bif, bhf), (wb, ub, bib, bhb) = dirs
        zero = jnp.zeros((H, H), jnp.float32)
        bf, bb = bif + bhf, bib + bhb
        w_cols, u_cols, b_segs = [], [], []
        for g in range(4):                       # gate-major, direction-minor
            w_cols += [wf[g * H:(g + 1) * H, :].T, wb[g * H:(g + 1) * H, :].T]
            u_cols += [jnp.concatenate([uf[g * H:(g + 1) * H, :].T, zero], 0),
                       jnp.concatenate([zero, ub[g * H:(g + 1) * H, :].T], 0)]
            b_segs += [bf[g * H:(g + 1) * H], bb[g * H:(g + 1) * H]]
        wih_packed = jnp.concatenate(w_cols, axis=1)          # [In, 8H]
        whh_packed = jnp.concatenate(u_cols, axis=1)          # [2H, 8H]
        b_packed = jnp.concatenate(b_segs).reshape(1, 8 * H)  # [1, 8H]
        return wih_packed, whh_packed, b_packed

    packed_layers = [pack_layer(d) for d in raw_layers]

    vocab_pad = _round_up(O, 128)
    emb_pad = jnp.zeros((vocab_pad, E), jnp.float32).at[:O].set(emb)

    o_pad = _round_up(O, 128)
    out_w_pad = jnp.zeros((2 * H, o_pad), jnp.float32).at[:, :O].set(out_w.T)
    out_b_pad = jnp.zeros((1, o_pad), jnp.float32).at[0, :O].set(out_b)

    return {
        # raw (PyTorch layout) -- used by the pure-JAX reference
        "embedding": emb, "lstm_raw": raw_layers,
        "out_w": out_w, "out_b": out_b,
        # packed / padded -- used by the fused Pallas kernel
        "embedding_pad": emb_pad, "lstm_packed": packed_layers,
        "out_w_pad": out_w_pad, "out_b_pad": out_b_pad,
    }


# ------------------------------ forward pass ---------------------------------


@functools.partial(jax.jit, static_argnums=0)
def decoder_forward(cfg: DecoderConfig, params, tokens, hidden, cell):
    """tokens: [B] int; hidden, cell: [2*L, B, H] (PyTorch order:
    layer0_fwd, layer0_bwd, layer1_fwd, ...).  Returns (prediction, hidden, cell).
    """
    O, H, L = cfg.output_dim, cfg.hid_dim, cfg.n_layers
    B = tokens.shape[0]
    B_pad = max(8, _round_up(B, 8))           # full sublane -> unmasked vld/vst
    S = 2 * L * H
    o_pad = params["out_w_pad"].shape[1]

    tok_pad = jnp.zeros((B_pad, 1), jnp.int32).at[:B, 0].set(
        tokens.astype(jnp.int32))

    def pack_state(s):                        # [2L, B, H] -> [B_pad, 2L*H]
        s2 = jnp.transpose(s, (1, 0, 2)).reshape(B, S)
        return jnp.zeros((B_pad, S), jnp.float32).at[:B].set(s2)

    h_p = pack_state(hidden)
    c_p = pack_state(cell)

    inputs = [tok_pad, params["embedding_pad"], h_p, c_p]
    for w, u, b in params["lstm_packed"]:
        inputs += [w, u, b]
    inputs += [params["out_w_pad"], params["out_b_pad"]]

    vmem = pl.BlockSpec(memory_space=pltpu.MemorySpace.VMEM)
    pred_pad, h_out, c_out = pl.pallas_call(
        functools.partial(_decoder_kernel, L, H),
        out_shape=[
            jax.ShapeDtypeStruct((B_pad, o_pad), jnp.float32),
            jax.ShapeDtypeStruct((B_pad, S), jnp.float32),
            jax.ShapeDtypeStruct((B_pad, S), jnp.float32),
        ],
        in_specs=[vmem] * len(inputs),
        out_specs=[vmem] * 3,
        # update h/c state in place (no extra [B_pad, 2LH] HBM alloc + copy)
        input_output_aliases={2: 1, 3: 2},
    )(*inputs)

    prediction = pred_pad[:B, :O]

    def unpack_state(s):                      # [B_pad, 2L*H] -> [2L, B, H]
        return jnp.transpose(s[:B].reshape(B, 2 * L, H), (1, 0, 2))

    return prediction, unpack_state(h_out), unpack_state(c_out)


# ---------------------------- pure-JAX reference -----------------------------


def _ref_lstm_cell(x, h, c, w_ih, w_hh, b_ih, b_hh):
    gates = x @ w_ih.T + h @ w_hh.T + b_ih + b_hh
    H = h.shape[-1]
    i = jax.nn.sigmoid(gates[:, :H])
    f = jax.nn.sigmoid(gates[:, H:2 * H])
    g = jnp.tanh(gates[:, 2 * H:3 * H])
    o = jax.nn.sigmoid(gates[:, 3 * H:])
    c_new = f * c + i * g
    return o * jnp.tanh(c_new), c_new


def decoder_forward_ref(cfg, params, tokens, hidden, cell):
    x = jnp.take(params["embedding"], tokens, axis=0)
    new_h, new_c = [], []
    for layer in range(cfg.n_layers):
        outs = []
        for d in range(2):
            idx = 2 * layer + d
            w_ih, w_hh, b_ih, b_hh = params["lstm_raw"][layer][d]
            h_n, c_n = _ref_lstm_cell(x, hidden[idx], cell[idx],
                                      w_ih, w_hh, b_ih, b_hh)
            new_h.append(h_n)
            new_c.append(c_n)
            outs.append(h_n)
        x = jnp.concatenate(outs, axis=-1)
    pred = x @ params["out_w"].T + params["out_b"]
    return pred, jnp.stack(new_h, 0), jnp.stack(new_c, 0)


# ----------------------------------- main ------------------------------------

if __name__ == "__main__":
    OUTPUT_DIM = 16   # vocab size
    EMB_DIM = 32
    HID_DIM = 32
    N_LAYERS = 2
    BATCH = 4

    cfg = DecoderConfig(OUTPUT_DIM, EMB_DIM, HID_DIM, N_LAYERS)

    key = jax.random.PRNGKey(0)
    k_par, k_tok, k_h, k_c = jax.random.split(key, 4)

    params = init_decoder_params(k_par, cfg)

    tokens = jax.random.randint(k_tok, (BATCH,), 0, OUTPUT_DIM, jnp.int32)
    hidden = jax.random.normal(k_h, (N_LAYERS * 2, BATCH, HID_DIM), jnp.float32)
    cell = jax.random.normal(k_c, (N_LAYERS * 2, BATCH, HID_DIM), jnp.float32)

    pred, h_new, c_new = decoder_forward(cfg, params, tokens, hidden, cell)
    jax.block_until_ready((pred, h_new, c_new))

    # Numerical check against a pure-JAX reference.
    pred_r, h_r, c_r = decoder_forward_ref(cfg, params, tokens, hidden, cell)
    assert pred.shape == (BATCH, OUTPUT_DIM)
    assert h_new.shape == (N_LAYERS * 2, BATCH, HID_DIM)
    assert c_new.shape == (N_LAYERS * 2, BATCH, HID_DIM)
    assert jnp.allclose(pred, pred_r, atol=1e-5, rtol=1e-5)
    assert jnp.allclose(h_new, h_r, atol=1e-5, rtol=1e-5)
    assert jnp.allclose(c_new, c_r, atol=1e-5, rtol=1e-5)

    print("KERNEL_OK")
</pallas_src>

<mosaic_0001>
module attributes {stable_mosaic.version = 11 : i64} {
  func.func @_decoder_kernel(%arg0: memref<8x1xi32, #tpu.memory_space<vmem>>, %arg1: memref<128x32xf32, #tpu.memory_space<vmem>>, %arg2: memref<8x128xf32, #tpu.memory_space<vmem>>, %arg3: memref<8x128xf32, #tpu.memory_space<vmem>>, %arg4: memref<32x256xf32, #tpu.memory_space<vmem>>, %arg5: memref<64x256xf32, #tpu.memory_space<vmem>>, %arg6: memref<1x256xf32, #tpu.memory_space<vmem>>, %arg7: memref<64x256xf32, #tpu.memory_space<vmem>>, %arg8: memref<64x256xf32, #tpu.memory_space<vmem>>, %arg9: memref<1x256xf32, #tpu.memory_space<vmem>>, %arg10: memref<64x128xf32, #tpu.memory_space<vmem>>, %arg11: memref<1x128xf32, #tpu.memory_space<vmem>>, %arg12: memref<8x128xf32, #tpu.memory_space<vmem>>, %arg13: memref<8x128xf32, #tpu.memory_space<vmem>>, %arg14: memref<8x128xf32, #tpu.memory_space<vmem>>) attributes {dimension_semantics = [], scalar_prefetch = 0 : i64, scratch_operands = 0 : i64, tpu.core_type = #tpu.core_type<tc>} {
    %c0 = arith.constant 0 : index
    %c0_0 = arith.constant 0 : index
    %0 = vector.load %arg0[%c0, %c0_0] : memref<8x1xi32, #tpu.memory_space<vmem>>, vector<8x1xi32>
    %1 = tpu.iota {dimensions = array<i32: 1>} : vector<8x128xi32>
    %2 = vector.broadcast %0 : vector<8x1xi32> to vector<8x128xi32>
    %3 = arith.cmpi eq, %1, %2 : vector<8x128xi32>
    %4 = arith.extui %3 : vector<8x128xi1> to vector<8x128xi32>
    %5 = arith.sitofp %4 : vector<8x128xi32> to vector<8x128xf32>
    %c0_1 = arith.constant 0 : index
    %c0_2 = arith.constant 0 : index
    %6 = vector.load %arg1[%c0_1, %c0_2] : memref<128x32xf32, #tpu.memory_space<vmem>>, vector<128x32xf32>
    %cst = arith.constant dense<0.000000e+00> : vector<8x32xf32>
    %7 = tpu.matmul %5, %6, %cst {dimension_numbers = #tpu.dot_dimension_numbers<[1], [0], [0], [1], [0, 0, 1, 1], [], []>} : vector<8x128xf32>, vector<128x32xf32>, vector<8x32xf32> -> vector<8x32xf32>
    %c0_3 = arith.constant 0 : index
    %c0_4 = arith.constant 0 : index
    %8 = vector.load %arg2[%c0_3, %c0_4] : memref<8x128xf32, #tpu.memory_space<vmem>>, vector<8x128xf32>
    %c0_5 = arith.constant 0 : index
    %c0_6 = arith.constant 0 : index
    %9 = vector.load %arg3[%c0_5, %c0_6] : memref<8x128xf32, #tpu.memory_space<vmem>>, vector<8x128xf32>
    %10 = vector.extract_strided_slice %8 {offsets = [0, 0], sizes = [8, 64], strides = [1, 1]} : vector<8x128xf32> to vector<8x64xf32>
    %11 = vector.extract_strided_slice %9 {offsets = [0, 0], sizes = [8, 64], strides = [1, 1]} : vector<8x128xf32> to vector<8x64xf32>
    %c0_7 = arith.constant 0 : index
    %c0_8 = arith.constant 0 : index
    %12 = vector.load %arg4[%c0_7, %c0_8] : memref<32x256xf32, #tpu.memory_space<vmem>>, vector<32x256xf32>
    %cst_9 = arith.constant dense<0.000000e+00> : vector<8x256xf32>
    %13 = tpu.matmul %7, %12, %cst_9 {dimension_numbers = #tpu.dot_dimension_numbers<[1], [0], [0], [1], [0, 0, 1, 1], [], []>} : vector<8x32xf32>, vector<32x256xf32>, vector<8x256xf32> -> vector<8x256xf32>
    %c0_10 = arith.constant 0 : index
    %c0_11 = arith.constant 0 : index
    %14 = vector.load %arg5[%c0_10, %c0_11] : memref<64x256xf32, #tpu.memory_space<vmem>>, vector<64x256xf32>
    %cst_12 = arith.constant dense<0.000000e+00> : vector<8x256xf32>
    %15 = tpu.matmul %10, %14, %cst_12 {dimension_numbers = #tpu.dot_dimension_numbers<[1], [0], [0], [1], [0, 0, 1, 1], [], []>} : vector<8x64xf32>, vector<64x256xf32>, vector<8x256xf32> -> vector<8x256xf32>
    %16 = arith.addf %13, %15 : vector<8x256xf32>
    %c0_13 = arith.constant 0 : index
    %c0_14 = arith.constant 0 : index
    %17 = vector.load %arg6[%c0_13, %c0_14] : memref<1x256xf32, #tpu.memory_space<vmem>>, vector<1x256xf32>
    %18 = vector.broadcast %17 : vector<1x256xf32> to vector<8x256xf32>
    %19 = arith.addf %16, %18 : vector<8x256xf32>
    %20 = vector.extract_strided_slice %19 {offsets = [0, 0], sizes = [8, 64], strides = [1, 1]} : vector<8x256xf32> to vector<8x64xf32>
    %21 = arith.negf %20 : vector<8x64xf32>
    %22 = math.exp %21 : vector<8x64xf32>
    %cst_15 = arith.constant 1.000000e+00 : f32
    %23 = vector.broadcast %cst_15 : f32 to vector<8x64xf32>
    %24 = arith.addf %23, %22 : vector<8x64xf32>
    %25 = arith.divf %23, %24 : vector<8x64xf32>
    %26 = vector.extract_strided_slice %19 {offsets = [0, 64], sizes = [8, 64], strides = [1, 1]} : vector<8x256xf32> to vector<8x64xf32>
    %27 = arith.negf %26 : vector<8x64xf32>
    %28 = math.exp %27 : vector<8x64xf32>
    %cst_16 = arith.constant 1.000000e+00 : f32
    %29 = vector.broadcast %cst_16 : f32 to vector<8x64xf32>
    %30 = arith.addf %29, %28 : vector<8x64xf32>
    %31 = arith.divf %29, %30 : vector<8x64xf32>
    %32 = vector.extract_strided_slice %19 {offsets = [0, 128], sizes = [8, 64], strides = [1, 1]} : vector<8x256xf32> to vector<8x64xf32>
    %33 = math.tanh %32 : vector<8x64xf32>
    %34 = vector.extract_strided_slice %19 {offsets = [0, 192], sizes = [8, 64], strides = [1, 1]} : vector<8x256xf32> to vector<8x64xf32>
    %35 = arith.negf %34 : vector<8x64xf32>
    %36 = math.exp %35 : vector<8x64xf32>
    %cst_17 = arith.constant 1.000000e+00 : f32
    %37 = vector.broadcast %cst_17 : f32 to vector<8x64xf32>
    %38 = arith.addf %37, %36 : vector<8x64xf32>
    %39 = arith.divf %37, %38 : vector<8x64xf32>
    %40 = arith.mulf %31, %11 : vector<8x64xf32>
    %41 = arith.mulf %25, %33 : vector<8x64xf32>
    %42 = arith.addf %40, %41 : vector<8x64xf32>
    %43 = math.tanh %42 : vector<8x64xf32>
    %44 = arith.mulf %39, %43 : vector<8x64xf32>
    %45 = vector.extract_strided_slice %8 {offsets = [0, 64], sizes = [8, 64], strides = [1, 1]} : vector<8x128xf32> to vector<8x64xf32>
    %46 = vector.extract_strided_slice %9 {offsets = [0, 64], sizes = [8, 64], strides = [1, 1]} : vector<8x128xf32> to vector<8x64xf32>
    %c0_18 = arith.constant 0 : index
    %c0_19 = arith.constant 0 : index
    %47 = vector.load %arg7[%c0_18, %c0_19] : memref<64x256xf32, #tpu.memory_space<vmem>>, vector<64x256xf32>
    %cst_20 = arith.constant dense<0.000000e+00> : vector<8x256xf32>
    %48 = tpu.matmul %44, %47, %cst_20 {dimension_numbers = #tpu.dot_dimension_numbers<[1], [0], [0], [1], [0, 0, 1, 1], [], []>} : vector<8x64xf32>, vector<64x256xf32>, vector<8x256xf32> -> vector<8x256xf32>
    %c0_21 = arith.constant 0 : index
    %c0_22 = arith.constant 0 : index
    %49 = vector.load %arg8[%c0_21, %c0_22] : memref<64x256xf32, #tpu.memory_space<vmem>>, vector<64x256xf32>
    %cst_23 = arith.constant dense<0.000000e+00> : vector<8x256xf32>
    %50 = tpu.matmul %45, %49, %cst_23 {dimension_numbers = #tpu.dot_dimension_numbers<[1], [0], [0], [1], [0, 0, 1, 1], [], []>} : vector<8x64xf32>, vector<64x256xf32>, vector<8x256xf32> -> vector<8x256xf32>
    %51 = arith.addf %48, %50 : vector<8x256xf32>
    %c0_24 = arith.constant 0 : index
    %c0_25 = arith.constant 0 : index
    %52 = vector.load %arg9[%c0_24, %c0_25] : memref<1x256xf32, #tpu.memory_space<vmem>>, vector<1x256xf32>
    %53 = vector.broadcast %52 : vector<1x256xf32> to vector<8x256xf32>
    %54 = arith.addf %51, %53 : vector<8x256xf32>
    %55 = vector.extract_strided_slice %54 {offsets = [0, 0], sizes = [8, 64], strides = [1, 1]} : vector<8x256xf32> to vector<8x64xf32>
    %56 = arith.negf %55 : vector<8x64xf32>
    %57 = math.exp %56 : vector<8x64xf32>
    %cst_26 = arith.constant 1.000000e+00 : f32
    %58 = vector.broadcast %cst_26 : f32 to vector<8x64xf32>
    %59 = arith.addf %58, %57 : vector<8x64xf32>
    %60 = arith.divf %58, %59 : vector<8x64xf32>
    %61 = vector.extract_strided_slice %54 {offsets = [0, 64], sizes = [8, 64], strides = [1, 1]} : vector<8x256xf32> to vector<8x64xf32>
    %62 = arith.negf %61 : vector<8x64xf32>
    %63 = math.exp %62 : vector<8x64xf32>
    %cst_27 = arith.constant 1.000000e+00 : f32
    %64 = vector.broadcast %cst_27 : f32 to vector<8x64xf32>
    %65 = arith.addf %64, %63 : vector<8x64xf32>
    %66 = arith.divf %64, %65 : vector<8x64xf32>
    %67 = vector.extract_strided_slice %54 {offsets = [0, 128], sizes = [8, 64], strides = [1, 1]} : vector<8x256xf32> to vector<8x64xf32>
    %68 = math.tanh %67 : vector<8x64xf32>
    %69 = vector.extract_strided_slice %54 {offsets = [0, 192], sizes = [8, 64], strides = [1, 1]} : vector<8x256xf32> to vector<8x64xf32>
    %70 = arith.negf %69 : vector<8x64xf32>
    %71 = math.exp %70 : vector<8x64xf32>
    %cst_28 = arith.constant 1.000000e+00 : f32
    %72 = vector.broadcast %cst_28 : f32 to vector<8x64xf32>
    %73 = arith.addf %72, %71 : vector<8x64xf32>
    %74 = arith.divf %72, %73 : vector<8x64xf32>
    %75 = arith.mulf %66, %46 : vector<8x64xf32>
    %76 = arith.mulf %60, %68 : vector<8x64xf32>
    %77 = arith.addf %75, %76 : vector<8x64xf32>
    %78 = math.tanh %77 : vector<8x64xf32>
    %79 = arith.mulf %74, %78 : vector<8x64xf32>
    %c0_29 = arith.constant 0 : index
    %c0_30 = arith.constant 0 : index
    %80 = vector.load %arg10[%c0_29, %c0_30] : memref<64x128xf32, #tpu.memory_space<vmem>>, vector<64x128xf32>
    %cst_31 = arith.constant dense<0.000000e+00> : vector<8x128xf32>
    %81 = tpu.matmul %79, %80, %cst_31 {dimension_numbers = #tpu.dot_dimension_numbers<[1], [0], [0], [1], [0, 0, 1, 1], [], []>} : vector<8x64xf32>, vector<64x128xf32>, vector<8x128xf32> -> vector<8x128xf32>
    %c0_32 = arith.constant 0 : index
    %c0_33 = arith.constant 0 : index
    %82 = vector.load %arg11[%c0_32, %c0_33] : memref<1x128xf32, #tpu.memory_space<vmem>>, vector<1x128xf32>
    %83 = vector.broadcast %82 : vector<1x128xf32> to vector<8x128xf32>
    %84 = arith.addf %81, %83 : vector<8x128xf32>
    %c0_34 = arith.constant 0 : index
    %c0_35 = arith.constant 0 : index
    %85 = vector.load %arg12[%c0_34, %c0_35] : memref<8x128xf32, #tpu.memory_space<vmem>>, vector<8x128xf32>
    tpu.vector_store %arg12[%c0_34, %c0_35], %84 {strides = array<i32>} : memref<8x128xf32, #tpu.memory_space<vmem>>, vector<8x128xf32>,
    %86 = tpu.concatenate %44, %79 in 1 : vector<8x64xf32>, vector<8x64xf32> -> vector<8x128xf32>
    %c0_36 = arith.constant 0 : index
    %c0_37 = arith.constant 0 : index
    %87 = vector.load %arg13[%c0_36, %c0_37] : memref<8x128xf32, #tpu.memory_space<vmem>>, vector<8x128xf32>
    tpu.vector_store %arg13[%c0_36, %c0_37], %86 {strides = array<i32>} : memref<8x128xf32, #tpu.memory_space<vmem>>, vector<8x128xf32>,
    %88 = tpu.concatenate %42, %77 in 1 : vector<8x64xf32>, vector<8x64xf32> -> vector<8x128xf32>
    %c0_38 = arith.constant 0 : index
    %c0_39 = arith.constant 0 : index
    %89 = vector.load %arg14[%c0_38, %c0_39] : memref<8x128xf32, #tpu.memory_space<vmem>>, vector<8x128xf32>
    tpu.vector_store %arg14[%c0_38, %c0_39], %88 {strides = array<i32>} : memref<8x128xf32, #tpu.memory_space<vmem>>, vector<8x128xf32>,
    return
  }
}

</mosaic_0001>

<llo_original>
// kernel: decoder_forward.1
$region0: #{decoder_forward.1}
  #allocation0 [shape = 'u32[]', space=smem, size = 0x4, offset = 0x4, fixed_abs, tag = 'smem constant byte address 0x4 - core index']
  #allocation1 [shape = 'u32[72,128]{1,0:T(1,128)}', space=vmem, size = 0x9000, scoped, tag = 'internal scratch']
  %s0 = inlined_call_operand.vmem [shape: s32[8,1], index: 0, kind: input, shape index: {}]
  %s1 = inlined_call_operand.vmem [shape: f32[128,32], index: 1, kind: input, shape index: {}]
  %s2 = inlined_call_operand.vmem [shape: f32[8,128], index: 2, kind: input, shape index: {}, may-alias: {2,13}]
  %s3 = inlined_call_operand.vmem [shape: f32[8,128], index: 3, kind: input, shape index: {}, may-alias: {3,14}]
  %s4 = inlined_call_operand.vmem [shape: f32[32,256], index: 4, kind: input, shape index: {}]
  %s5 = inlined_call_operand.vmem [shape: f32[64,256], index: 5, kind: input, shape index: {}]
  %s6 = inlined_call_operand.vmem [shape: f32[1,256], index: 6, kind: input, shape index: {}]
  %s7 = inlined_call_operand.hbm [shape: f32[64,256], index: 7, kind: input, shape index: {}]
  %s8 = inlined_call_operand.hbm [shape: f32[64,256], index: 8, kind: input, shape index: {}]
  %s9 = inlined_call_operand.vmem [shape: f32[1,256], index: 9, kind: input, shape index: {}]
  %s10 = inlined_call_operand.hbm [shape: f32[64,128], index: 10, kind: input, shape index: {}]
  %s11 = inlined_call_operand.vmem [shape: f32[1,128], index: 11, kind: input, shape index: {}]
  %s12 = inlined_call_operand.vmem [shape: f32[8,128], index: 12, kind: output, shape index: {0}]
  %s13 = inlined_call_operand.vmem [shape: f32[8,128], index: 13, kind: output, shape index: {1}, may-alias: {2,13}]
  %s14 = inlined_call_operand.vmem [shape: f32[8,128], index: 14, kind: output, shape index: {2}, may-alias: {3,14}]
  %15 = xla_tuple %s12, %s13, %s14
  %s16 = sld [smem:[#allocation0]]
  $region86: #{decoder_forward.1} parent=0
    _
  %s18 = ssub.s32 1, %s16
  %s19 = scalar_select 0, %s18, %s16
  $region1: #{decoder_forward.1} parent=0
    #allocation2 [shape = 'u8[65536]{0}', space=vmem, size = 0x10000, scoped, tag = 'input window, operand 7, single buffered']
    #allocation3 [shape = 's32[1]{0}', space=sflag, size = 0x4, scoped, tag = 'scoped memory for decoder_forward.1']
    #allocation4 [shape = 'u8[65536]{0}', space=vmem, size = 0x10000, scoped, tag = 'input window, operand 8, single buffered']
    #allocation5 [shape = 's32[1]{0}', space=sflag, size = 0x4, scoped, tag = 'scoped memory for decoder_forward.1']
    #allocation6 [shape = 'u8[32768]{0}', space=vmem, size = 0x8000, scoped, tag = 'input window, operand 10, single buffered']
    %20 = vsyncpa [#allocation3], 0
    %21 = vsyncpa [#allocation5], 0
    // Predicated region
    $region2: #{decoder_forward.1} parent=1 // pred_check
      _
    $region3: #{decoder_forward.1} parent=1 // pred_check_branch
      %23 = sbr.rel (0) target = $region5
    $region4: #{decoder_forward.1} parent=1 // pred_region
      _
    $region5: #{decoder_forward.1} parent=1 // pred_fallthru
      _
    // Predicated region
    $region6: #{decoder_forward.1} parent=1 // pred_check
      _
    $region7: #{decoder_forward.1} parent=1 // pred_check_branch
      %25 = sbr.rel (0) target = $region9
    $region8: #{decoder_forward.1} parent=1 // pred_region
      _
    $region9: #{decoder_forward.1} parent=1 // pred_fallthru
      _
    // Predicated region
    $region10: #{decoder_forward.1} parent=1 // pred_check
      _
    $region11: #{decoder_forward.1} parent=1 // pred_check_branch
      %27 = sbr.rel (0) target = $region13
    $region12: #{decoder_forward.1} parent=1 // pred_region
      _
    $region13: #{decoder_forward.1} parent=1 // pred_fallthru
      _
    // Predicated region
    $region14: #{decoder_forward.1} parent=1 // pred_check
      _
    $region15: #{decoder_forward.1} parent=1 // pred_check_branch
      %29 = sbr.rel (0) target = $region17
    $region16: #{decoder_forward.1} parent=1 // pred_region
      _
    $region17: #{decoder_forward.1} parent=1 // pred_fallthru
      _
    // Predicated region
    $region18: #{decoder_forward.1} parent=1 // pred_check
      _
    $region19: #{decoder_forward.1} parent=1 // pred_check_branch
      %31 = sbr.rel (0) target = $region21
    $region20: #{decoder_forward.1} parent=1 // pred_region
      _
    $region21: #{decoder_forward.1} parent=1 // pred_fallthru
      _
    // Predicated region
    $region22: #{decoder_forward.1} parent=1 // pred_check
      _
    $region23: #{decoder_forward.1} parent=1 // pred_check_branch
      %33 = sbr.rel (0) target = $region25
    $region24: #{decoder_forward.1} parent=1 // pred_region
      _
    $region25: #{decoder_forward.1} parent=1 // pred_fallthru
      _
    // Predicated region
    $region26: #{decoder_forward.1} parent=1 // pred_check
      _
    $region27: #{decoder_forward.1} parent=1 // pred_check_branch
      %35 = sbr.rel (0) target = $region29
    $region28: #{decoder_forward.1} parent=1 // pred_region
      _
    $region29: #{decoder_forward.1} parent=1 // pred_fallthru
      _
    // Predicated region
    $region30: #{decoder_forward.1} parent=1 // pred_check
      _
    $region31: #{decoder_forward.1} parent=1 // pred_check_branch
      %37 = sbr.rel (0) target = $region33
    $region32: #{decoder_forward.1} parent=1 // pred_region
      %39 = vsyncadd [#allocation3], 0
      %s40 = sshll.u32 %s7, 4
      %s41 = int_to_ptr.hbm [resolvable:$true] %s40
      %s42 = sshll.u32 [#allocation2], 4
      %s43 = int_to_ptr.vmem [resolvable:$true] %s42
      %48 = dma.hbm_to_vmem [thread:$0]  %s41, 2048, %s43, [#allocation3], 256, 256, 16
    $region33: #{decoder_forward.1} parent=1 // pred_fallthru
      _
    // Predicated region
    $region34: #{decoder_forward.1} parent=1 // pred_check
      _
    $region35: #{decoder_forward.1} parent=1 // pred_check_branch
      %50 = sbr.rel (0) target = $region37
    $region36: #{decoder_forward.1} parent=1 // pred_region
      %52 = vsyncadd [#allocation5], 0
      %s53 = sshll.u32 %s8, 4
      %s54 = int_to_ptr.hbm [resolvable:$true] %s53
      %s55 = sshll.u32 [#allocation4], 4
      %s56 = int_to_ptr.vmem [resolvable:$true] %s55
      %61 = dma.hbm_to_vmem [thread:$0]  %s54, 2048, %s56, [#allocation5], 256, 256, 16
    $region37: #{decoder_forward.1} parent=1 // pred_fallthru
      _
    // Predicated region
    $region38: #{decoder_forward.1} parent=1 // pred_check
      _
    $region39: #{decoder_forward.1} parent=1 // pred_check_branch
      %63 = sbr.rel (0) target = $region41
    $region40: #{decoder_forward.1} parent=1 // pred_region
      _
    $region41: #{decoder_forward.1} parent=1 // pred_fallthru
      _
    // Predicated region
    $region42: #{decoder_forward.1} parent=1 // pred_check
      _
    $region43: #{decoder_forward.1} parent=1 // pred_check_branch
      %65 = sbr.rel (0) target = $region45
    $region44: #{decoder_forward.1} parent=1 // pred_region
      %67 = vsyncadd [#allocation5], 0
      %s68 = sshll.u32 %s10, 4
      %s69 = int_to_ptr.hbm [resolvable:$true] %s68
      %s70 = sshll.u32 [#allocation6], 4
      %s71 = int_to_ptr.vmem [resolvable:$true] %s70
      %76 = dma.hbm_to_vmem [thread:$0]  %s69, 1024, %s71, [#allocation5], 128, 128, 8
    $region45: #{decoder_forward.1} parent=1 // pred_fallthru
      _
    // Predicated region
    $region46: #{decoder_forward.1} parent=1 // pred_check
      _
    $region47: #{decoder_forward.1} parent=1 // pred_check_branch
      %78 = sbr.rel (0) target = $region49
    $region48: #{decoder_forward.1} parent=1 // pred_region
      _
    $region49: #{decoder_forward.1} parent=1 // pred_fallthru
      _
    // Predicated region
    $region50: #{decoder_forward.1} parent=1 // pred_check
      _
    $region51: #{decoder_forward.1} parent=1 // pred_check_branch
      %80 = sbr.rel (0) target = $region53
    $region52: #{decoder_forward.1} parent=1 // pred_region
      %82 = dma.done [#allocation3], 2048
    $region53: #{decoder_forward.1} parent=1 // pred_fallthru
      _
    // Predicated region
    $region54: #{decoder_forward.1} parent=1 // pred_check
      _
    $region55: #{decoder_forward.1} parent=1 // pred_check_branch
      %84 = sbr.rel (0) target = $region57
    $region56: #{decoder_forward.1} parent=1 // pred_region
      %86 = dma.done [#allocation5], 2048
    $region57: #{decoder_forward.1} parent=1 // pred_fallthru
      _
    // Predicated region
    $region58: #{decoder_forward.1} parent=1 // pred_check
      _
    $region59: #{decoder_forward.1} parent=1 // pred_check_branch
      %88 = sbr.rel (0) target = $region61
    $region60: #{decoder_forward.1} parent=1 // pred_region
      %90 = dma.done [#allocation5], 1024
    $region61: #{decoder_forward.1} parent=1 // pred_fallthru
      _
    %v91 = vld [vmem:[%s0] sm:$0xff]
    %v92 = vlaneseq
    %v93 = vand.u32 %v92, 127
    %94 = vset.pattern.permute.xlu0 0
    %95 = vperm.xlu0 %94, %v91
    %v96 = vpop.permute.xlu0 %95
    %vm97 = vcmp.eq.s32.totalorder %v93, %v96
    %v98 = vsel %vm97, 1, 0
    %v99 = vcvt.s32.f32 %v98
    %v100 = vld [vmem:[%s1] sm:$0xff]
    %v101 = vld [vmem:[%s1 + $0x8] sm:$0xff]
    %v102 = vld [vmem:[%s1 + $0x10] sm:$0xff]
    %v103 = vld [vmem:[%s1 + $0x18] sm:$0xff]
    %v104 = vld [vmem:[%s1 + $0x20] sm:$0xff]
    %v105 = vld [vmem:[%s1 + $0x28] sm:$0xff]
    %v106 = vld [vmem:[%s1 + $0x30] sm:$0xff]
    %v107 = vld [vmem:[%s1 + $0x38] sm:$0xff]
    %v108 = vld [vmem:[%s1 + $0x40] sm:$0xff]
    %v109 = vld [vmem:[%s1 + $0x48] sm:$0xff]
    %v110 = vld [vmem:[%s1 + $0x50] sm:$0xff]
    %v111 = vld [vmem:[%s1 + $0x58] sm:$0xff]
    %v112 = vld [vmem:[%s1 + $0x60] sm:$0xff]
    %v113 = vld [vmem:[%s1 + $0x68] sm:$0xff]
    %v114 = vld [vmem:[%s1 + $0x70] sm:$0xff]
    %v115 = vld [vmem:[%s1 + $0x78] sm:$0xff]
    %116 = vmatpush.msra.mxu0 %v115
    %117 = vmatpush.msra.mxu0 %v114
    %118 = vmatpush.msra.mxu0 %v113
    %119 = vmatpush.msra.mxu0 %v112
    %120 = vmatpush.msra.mxu0 %v111
    %121 = vmatpush.msra.mxu0 %v110
    %122 = vmatpush.msra.mxu0 %v109
    %123 = vmatpush.msra.mxu0 %v108
    %124 = vmatpush.msra.mxu0 %v107
    %125 = vmatpush.msra.mxu0 %v106
    %126 = vmatpush.msra.mxu0 %v105
    %127 = vmatpush.msra.mxu0 %v104
    %128 = vmatpush.msra.mxu0 %v103
    %129 = vmatpush.msra.mxu0 %v102
    %130 = vmatpush.msra.mxu0 %v101
    %131 = vmatpush.msra.mxu0 %v100
    %132 = vmatmul.f32.gmra.mxu0 %v99
    %v133 = vpop.f32.mrf.mxu0
    %v134 = vadd.f32 0.0, %v133
    %135 = vdwg.mxu0
    %v136 = vld [vmem:[%s2] sm:$0xff]
    %v137 = vld [vmem:[%s3] sm:$0xff]
    %v138 = vld [vmem:[%s4] sm:$0xff]
    %v139 = vld [vmem:[%s4 + $0x8] sm:$0xff]
    %v140 = vld [vmem:[%s4 + $0x10] sm:$0xff]
    %v141 = vld [vmem:[%s4 + $0x18] sm:$0xff]
    %v142 = vld [vmem:[%s4 + $0x20] sm:$0xff]
    %v143 = vld [vmem:[%s4 + $0x28] sm:$0xff]
    %v144 = vld [vmem:[%s4 + $0x30] sm:$0xff]
    %v145 = vld [vmem:[%s4 + $0x38] sm:$0xff]
    %v146 = vld [vmem:[%s5] sm:$0xff]
    %v147 = vld [vmem:[%s5 + $0x8] sm:$0xff]
    %v148 = vld [vmem:[%s5 + $0x10] sm:$0xff]
    %v149 = vld [vmem:[%s5 + $0x18] sm:$0xff]
    %v150 = vld [vmem:[%s5 + $0x20] sm:$0xff]
    %v151 = vld [vmem:[%s5 + $0x28] sm:$0xff]
    %v152 = vld [vmem:[%s5 + $0x30] sm:$0xff]
    %v153 = vld [vmem:[%s5 + $0x38] sm:$0xff]
    %v154 = vld [vmem:[%s5 + $0x40] sm:$0xff]
    %v155 = vld [vmem:[%s5 + $0x48] sm:$0xff]
    %v156 = vld [vmem:[%s5 + $0x50] sm:$0xff]
    %v157 = vld [vmem:[%s5 + $0x58] sm:$0xff]
    %v158 = vld [vmem:[%s5 + $0x60] sm:$0xff]
    %v159 = vld [vmem:[%s5 + $0x68] sm:$0xff]
    %v160 = vld [vmem:[%s5 + $0x70] sm:$0xff]
    %v161 = vld [vmem:[%s5 + $0x78] sm:$0xff]
    %vm162 = vcmask 523264
    %v164 = vsel %vm162, %v136, 0
    %166 = vmatpush.msra.mxu0 0.0
    %167 = vmatpush.msra.mxu0 0.0
    %168 = vmatpush.msra.mxu0 0.0
    %169 = vmatpush.msra.mxu0 0.0
    %170 = vmatpush.msra.mxu0 0.0
    %171 = vmatpush.msra.mxu0 0.0
    %172 = vmatpush.msra.mxu0 0.0
    %173 = vmatpush.msra.mxu0 0.0
    %174 = vmatpush.msra.mxu0 %v160
    %175 = vmatpush.msra.mxu0 %v158
    %176 = vmatpush.msra.mxu0 %v156
    %177 = vmatpush.msra.mxu0 %v154
    %178 = vmatpush.msra.mxu0 %v152
    %179 = vmatpush.msra.mxu0 %v150
    %180 = vmatpush.msra.mxu0 %v148
    %181 = vmatpush.msra.mxu0 %v146
    %182 = vmatmul.f32.gmra.mxu0 %v164
    %v183 = vpop.f32.mrf.mxu0
    %v184 = vadd.f32 0.0, %v183
    %185 = vdwg.mxu0
    %186 = vmatpush.msra.mxu0 0.0
    %187 = vmatpush.msra.mxu0 0.0
    %188 = vmatpush.msra.mxu0 0.0
    %189 = vmatpush.msra.mxu0 0.0
    %190 = vmatpush.msra.mxu0 0.0
    %191 = vmatpush.msra.mxu0 0.0
    %192 = vmatpush.msra.mxu0 0.0
    %193 = vmatpush.msra.mxu0 0.0
    %194 = vmatpush.msra.mxu0 %v161
    %195 = vmatpush.msra.mxu0 %v159
    %196 = vmatpush.msra.mxu0 %v157
    %197 = vmatpush.msra.mxu0 %v155
    %198 = vmatpush.msra.mxu0 %v153
    %199 = vmatpush.msra.mxu0 %v151
    %200 = vmatpush.msra.mxu0 %v149
    %201 = vmatpush.msra.mxu0 %v147
    %202 = vmatmul.f32.gmra.mxu0 %v164
    %v203 = vpop.f32.mrf.mxu0
    %v204 = vadd.f32 0.0, %v203
    %205 = vdwg.mxu0
    %vm206 = vcmask 261120
    %v208 = vsel %vm206, %v134, 0
    %210 = vmatpush.msra.mxu0 0.0
    %211 = vmatpush.msra.mxu0 0.0
    %212 = vmatpush.msra.mxu0 0.0
    %213 = vmatpush.msra.mxu0 0.0
    %214 = vmatpush.msra.mxu0 0.0
    %215 = vmatpush.msra.mxu0 0.0
    %216 = vmatpush.msra.mxu0 0.0
    %217 = vmatpush.msra.mxu0 0.0
    %218 = vmatpush.msra.mxu0 0.0
    %219 = vmatpush.msra.mxu0 0.0
    %220 = vmatpush.msra.mxu0 0.0
    %221 = vmatpush.msra.mxu0 0.0
    %222 = vmatpush.msra.mxu0 %v144
    %223 = vmatpush.msra.mxu0 %v142
    %224 = vmatpush.msra.mxu0 %v140
    %225 = vmatpush.msra.mxu0 %v138
    %226 = vmatmul.f32.gmra.mxu0 %v208
    %v227 = vpop.f32.mrf.mxu0
    %v228 = vadd.f32 %v184, %v227
    %229 = vdwg.mxu0
    %230 = vmatpush.msra.mxu0 0.0
    %231 = vmatpush.msra.mxu0 0.0
    %232 = vmatpush.msra.mxu0 0.0
    %233 = vmatpush.msra.mxu0 0.0
    %234 = vmatpush.msra.mxu0 0.0
    %235 = vmatpush.msra.mxu0 0.0
    %236 = vmatpush.msra.mxu0 0.0
    %237 = vmatpush.msra.mxu0 0.0
    %238 = vmatpush.msra.mxu0 0.0
    %239 = vmatpush.msra.mxu0 0.0
    %240 = vmatpush.msra.mxu0 0.0
    %241 = vmatpush.msra.mxu0 0.0
    %242 = vmatpush.msra.mxu0 %v145
    %243 = vmatpush.msra.mxu0 %v143
    %244 = vmatpush.msra.mxu0 %v141
    %245 = vmatpush.msra.mxu0 %v139
    %246 = vmatmul.f32.gmra.mxu0 %v208
    %v247 = vpop.f32.mrf.mxu0
    %v248 = vadd.f32 %v204, %v247
    %249 = vdwg.mxu0
    %v250 = vld [vmem:[%s6] sm:$0x3]
    %v252 = vperm.slane %v250, 0
    %v253 = vperm.slane %v250, 1
    %v256 = vadd.f32 %v228, %v252
    %v257 = vadd.f32 %v248, %v253
    %v258 = vxor.u32 %v256, 2147483648
    %v259 = vmul.f32 %v258, 1.442695
    %v260 = vpow.pop %v259
    %v261 = vadd.f32 %v260, 1.0
    %v262 = vrcp.pop %v261
    %v263 = vmul.f32 %v261, %v262
    %v264 = vsub.f32 1.0, %v263
    %v265 = vmul.f32 %v262, %v264
    %v266 = vadd.f32 %v262, %v265
    %vm267 = vweird.f32 %v261
    %vm268 = vweird.f32 %v262
    %vm269 = vmor %vm267, %vm268
    %v270 = vsel %vm269, %v262, %v266
    %v271 = vand.u32 2147483647, %v261
    %vm272 = vcmp.eq.f32.partialorder %v271, 8.507059e+37
    %v273 = vand.u32 %v261, 2147483648
    %v274 = vor.u32 1.1754944e-38, %v273
    %v275 = vsel %vm272, %v274, %v270
    %v276 = vmul.f32 1.0, %v275
    %v277 = vtanh.pop %v257
    %v278 = vxor.u32 %v257, 2147483648
    %v279 = vmul.f32 %v278, 1.442695
    %v280 = vpow.pop %v279
    %v281 = vadd.f32 %v280, 1.0
    %v282 = vrcp.pop %v281
    %v283 = vmul.f32 %v281, %v282
    %v284 = vsub.f32 1.0, %v283
    %v285 = vmul.f32 %v282, %v284
    %v286 = vadd.f32 %v282, %v285
    %vm287 = vweird.f32 %v281
    %vm288 = vweird.f32 %v282
    %vm289 = vmor %vm287, %vm288
    %v290 = vsel %vm289, %v282, %v286
    %v291 = vand.u32 2147483647, %v281
    %vm292 = vcmp.eq.f32.partialorder %v291, 8.507059e+37
    %v293 = vand.u32 %v281, 2147483648
    %v294 = vor.u32 1.1754944e-38, %v293
    %v295 = vsel %vm292, %v294, %v290
    %v296 = vmul.f32 1.0, %v295
    %298 = vrot.lane.b32.xlu0 %v137, 64
    %v299 = vpop.permute.xlu0 %298
    %v301 = vmul.f32 %v276, %v299
    %v302 = vmul.f32 %v276, %v277
    %304 = vrot.lane.b32.xlu0 %v302, 64
    %v305 = vpop.permute.xlu0 %304
    %v307 = vadd.f32 %v301, %v305
    %v308 = vtanh.pop %v307
    %v309 = vmul.f32 %v296, %v308
    %v310 = vld [vmem:[#allocation2] sm:$0xff]
    %v311 = vld [vmem:[#allocation2 + $0x8] sm:$0xff]
    %v312 = vld [vmem:[#allocation2 + $0x10] sm:$0xff]
    %v313 = vld [vmem:[#allocation2 + $0x18] sm:$0xff]
    %v314 = vld [vmem:[#allocation2 + $0x20] sm:$0xff]
    %v315 = vld [vmem:[#allocation2 + $0x28] sm:$0xff]
    %v316 = vld [vmem:[#allocation2 + $0x30] sm:$0xff]
    %v317 = vld [vmem:[#allocation2 + $0x38] sm:$0xff]
    %v318 = vld [vmem:[#allocation2 + $0x40] sm:$0xff]
    %v319 = vld [vmem:[#allocation2 + $0x48] sm:$0xff]
    %v320 = vld [vmem:[#allocation2 + $0x50] sm:$0xff]
    %v321 = vld [vmem:[#allocation2 + $0x58] sm:$0xff]
    %v322 = vld [vmem:[#allocation2 + $0x60] sm:$0xff]
    %v323 = vld [vmem:[#allocation2 + $0x68] sm:$0xff]
    %v324 = vld [vmem:[#allocation2 + $0x70] sm:$0xff]
    %v325 = vld [vmem:[#allocation2 + $0x78] sm:$0xff]
    %v326 = vld [vmem:[#allocation4] sm:$0xff]
    %v327 = vld [vmem:[#allocation4 + $0x8] sm:$0xff]
    %v328 = vld [vmem:[#allocation4 + $0x10] sm:$0xff]
    %v329 = vld [vmem:[#allocation4 + $0x18] sm:$0xff]
    %v330 = vld [vmem:[#allocation4 + $0x20] sm:$0xff]
    %v331 = vld [vmem:[#allocation4 + $0x28] sm:$0xff]
    %v332 = vld [vmem:[#allocation4 + $0x30] sm:$0xff]
    %v333 = vld [vmem:[#allocation4 + $0x38] sm:$0xff]
    %v334 = vld [vmem:[#allocation4 + $0x40] sm:$0xff]
    %v335 = vld [vmem:[#allocation4 + $0x48] sm:$0xff]
    %v336 = vld [vmem:[#allocation4 + $0x50] sm:$0xff]
    %v337 = vld [vmem:[#allocation4 + $0x58] sm:$0xff]
    %v338 = vld [vmem:[#allocation4 + $0x60] sm:$0xff]
    %v339 = vld [vmem:[#allocation4 + $0x68] sm:$0xff]
    %v340 = vld [vmem:[#allocation4 + $0x70] sm:$0xff]
    %v341 = vld [vmem:[#allocation4 + $0x78] sm:$0xff]
    %342 = vrot.lane.b32.xlu0 %v136, 64
    %v343 = vpop.permute.xlu0 %342
    %v344 = vsel %vm162, %v343, 0
    %346 = vmatpush.msra.mxu0 0.0
    %347 = vmatpush.msra.mxu0 0.0
    %348 = vmatpush.msra.mxu0 0.0
    %349 = vmatpush.msra.mxu0 0.0
    %350 = vmatpush.msra.mxu0 0.0
    %351 = vmatpush.msra.mxu0 0.0
    %352 = vmatpush.msra.mxu0 0.0
    %353 = vmatpush.msra.mxu0 0.0
    %354 = vmatpush.msra.mxu0 %v340
    %355 = vmatpush.msra.mxu0 %v338
    %356 = vmatpush.msra.mxu0 %v336
    %357 = vmatpush.msra.mxu0 %v334
    %358 = vmatpush.msra.mxu0 %v332
    %359 = vmatpush.msra.mxu0 %v330
    %360 = vmatpush.msra.mxu0 %v328
    %361 = vmatpush.msra.mxu0 %v326
    %362 = vmatmul.f32.gmra.mxu0 %v344
    %v363 = vpop.f32.mrf.mxu0
    %v364 = vadd.f32 0.0, %v363
    %365 = vdwg.mxu0
    %366 = vmatpush.msra.mxu0 0.0
    %367 = vmatpush.msra.mxu0 0.0
    %368 = vmatpush.msra.mxu0 0.0
    %369 = vmatpush.msra.mxu0 0.0
    %370 = vmatpush.msra.mxu0 0.0
    %371 = vmatpush.msra.mxu0 0.0
    %372 = vmatpush.msra.mxu0 0.0
    %373 = vmatpush.msra.mxu0 0.0
    %374 = vmatpush.msra.mxu0 %v341
    %375 = vmatpush.msra.mxu0 %v339
    %376 = vmatpush.msra.mxu0 %v337
    %377 = vmatpush.msra.mxu0 %v335
    %378 = vmatpush.msra.mxu0 %v333
    %379 = vmatpush.msra.mxu0 %v331
    %380 = vmatpush.msra.mxu0 %v329
    %381 = vmatpush.msra.mxu0 %v327
    %382 = vmatmul.f32.gmra.mxu0 %v344
    %v383 = vpop.f32.mrf.mxu0
    %v384 = vadd.f32 0.0, %v383
    %385 = vdwg.mxu0
    %387 = vrot.lane.b32.xlu0 %v309, 64
    %v388 = vpop.permute.xlu0 %387
    %v389 = vsel %vm162, %v388, 0
    %391 = vmatpush.msra.mxu0 0.0
    %392 = vmatpush.msra.mxu0 0.0
    %393 = vmatpush.msra.mxu0 0.0
    %394 = vmatpush.msra.mxu0 0.0
    %395 = vmatpush.msra.mxu0 0.0
    %396 = vmatpush.msra.mxu0 0.0
    %397 = vmatpush.msra.mxu0 0.0
    %398 = vmatpush.msra.mxu0 0.0
    %399 = vmatpush.msra.mxu0 %v324
    %400 = vmatpush.msra.mxu0 %v322
    %401 = vmatpush.msra.mxu0 %v320
    %402 = vmatpush.msra.mxu0 %v318
    %403 = vmatpush.msra.mxu0 %v316
    %404 = vmatpush.msra.mxu0 %v314
    %405 = vmatpush.msra.mxu0 %v312
    %406 = vmatpush.msra.mxu0 %v310
    %407 = vmatmul.f32.gmra.mxu0 %v389
    %v408 = vpop.f32.mrf.mxu0
    %v409 = vadd.f32 %v364, %v408
    %410 = vdwg.mxu0
    %411 = vmatpush.msra.mxu0 0.0
    %412 = vmatpush.msra.mxu0 0.0
    %413 = vmatpush.msra.mxu0 0.0
    %414 = vmatpush.msra.mxu0 0.0
    %415 = vmatpush.msra.mxu0 0.0
    %416 = vmatpush.msra.mxu0 0.0
    %417 = vmatpush.msra.mxu0 0.0
    %418 = vmatpush.msra.mxu0 0.0
    %419 = vmatpush.msra.mxu0 %v325
    %420 = vmatpush.msra.mxu0 %v323
    %421 = vmatpush.msra.mxu0 %v321
    %422 = vmatpush.msra.mxu0 %v319
    %423 = vmatpush.msra.mxu0 %v317
    %424 = vmatpush.msra.mxu0 %v315
    %425 = vmatpush.msra.mxu0 %v313
    %426 = vmatpush.msra.mxu0 %v311
    %427 = vmatmul.f32.gmra.mxu0 %v389
    %v428 = vpop.f32.mrf.mxu0
    %v429 = vadd.f32 %v384, %v428
    %430 = vdwg.mxu0
    %v431 = vld [vmem:[%s9] sm:$0x3]
    %v433 = vperm.slane %v431, 0
    %v434 = vperm.slane %v431, 1
    %v437 = vadd.f32 %v409, %v433
    %v438 = vadd.f32 %v429, %v434
    %v439 = vxor.u32 %v437, 2147483648
    %v440 = vmul.f32 %v439, 1.442695
    %v441 = vpow.pop %v440
    %v442 = vadd.f32 %v441, 1.0
    %v443 = vrcp.pop %v442
    %v444 = vmul.f32 %v442, %v443
    %v445 = vsub.f32 1.0, %v444
    %v446 = vmul.f32 %v443, %v445
    %v447 = vadd.f32 %v443, %v446
    %vm448 = vweird.f32 %v442
    %vm449 = vweird.f32 %v443
    %vm450 = vmor %vm448, %vm449
    %v451 = vsel %vm450, %v443, %v447
    %v452 = vand.u32 2147483647, %v442
    %vm453 = vcmp.eq.f32.partialorder %v452, 8.507059e+37
    %v454 = vand.u32 %v442, 2147483648
    %v455 = vor.u32 1.1754944e-38, %v454
    %v456 = vsel %vm453, %v455, %v451
    %v457 = vmul.f32 1.0, %v456
    %v458 = vtanh.pop %v438
    %v459 = vxor.u32 %v438, 2147483648
    %v460 = vmul.f32 %v459, 1.442695
    %v461 = vpow.pop %v460
    %v462 = vadd.f32 %v461, 1.0
    %v463 = vrcp.pop %v462
    %v464 = vmul.f32 %v462, %v463
    %v465 = vsub.f32 1.0, %v464
    %v466 = vmul.f32 %v463, %v465
    %v467 = vadd.f32 %v463, %v466
    %vm468 = vweird.f32 %v462
    %vm469 = vweird.f32 %v463
    %vm470 = vmor %vm468, %vm469
    %v471 = vsel %vm470, %v463, %v467
    %v472 = vand.u32 2147483647, %v462
    %vm473 = vcmp.eq.f32.partialorder %v472, 8.507059e+37
    %v474 = vand.u32 %v462, 2147483648
    %v475 = vor.u32 1.1754944e-38, %v474
    %v476 = vsel %vm473, %v475, %v471
    %v477 = vmul.f32 1.0, %v476
    %v478 = vmul.f32 %v457, %v137
    %v479 = vmul.f32 %v457, %v458
    %481 = vrot.lane.b32.xlu0 %v479, 64
    %v482 = vpop.permute.xlu0 %481
    %v484 = vadd.f32 %v478, %v482
    %v485 = vtanh.pop %v484
    %v486 = vmul.f32 %v477, %v485
    %v487 = vld [vmem:[#allocation6] sm:$0xff]
    %v488 = vld [vmem:[#allocation6 + $0x8] sm:$0xff]
    %v489 = vld [vmem:[#allocation6 + $0x10] sm:$0xff]
    %v490 = vld [vmem:[#allocation6 + $0x18] sm:$0xff]
    %v491 = vld [vmem:[#allocation6 + $0x20] sm:$0xff]
    %v492 = vld [vmem:[#allocation6 + $0x28] sm:$0xff]
    %v493 = vld [vmem:[#allocation6 + $0x30] sm:$0xff]
    %v494 = vld [vmem:[#allocation6 + $0x38] sm:$0xff]
    %v495 = vld [vmem:[%s11] sm:$0x1]
    %v497 = vperm.slane %v495, 0
    %500 = vrot.lane.b32.xlu0 %v486, 64
    %v501 = vpop.permute.xlu0 %500
    %v502 = vsel %vm162, %v501, 0
    %504 = vmatpush.msra.mxu0 0.0
    %505 = vmatpush.msra.mxu0 0.0
    %506 = vmatpush.msra.mxu0 0.0
    %507 = vmatpush.msra.mxu0 0.0
    %508 = vmatpush.msra.mxu0 0.0
    %509 = vmatpush.msra.mxu0 0.0
    %510 = vmatpush.msra.mxu0 0.0
    %511 = vmatpush.msra.mxu0 0.0
    %512 = vmatpush.msra.mxu0 %v494
    %513 = vmatpush.msra.mxu0 %v493
    %514 = vmatpush.msra.mxu0 %v492
    %515 = vmatpush.msra.mxu0 %v491
    %516 = vmatpush.msra.mxu0 %v490
    %517 = vmatpush.msra.mxu0 %v489
    %518 = vmatpush.msra.mxu0 %v488
    %519 = vmatpush.msra.mxu0 %v487
    %520 = vmatmul.f32.gmra.mxu0 %v502
    %v521 = vpop.f32.mrf.mxu0
    %v522 = vadd.f32 %v497, %v521
    %523 = vdwg.mxu0
    %524 = vst [vmem:[%s12] sm:$0xff] %v522
    %v526 = vsel %vm162, %v388, %v486
    %527 = vst [vmem:[%s13] sm:$0xff] %v526
    %529 = vrot.lane.b32.xlu0 %v307, 64
    %v530 = vpop.permute.xlu0 %529
    %v532 = vsel %vm162, %v530, %v484
    %533 = vst [vmem:[%s14] sm:$0xff] %v532
    // Predicated region
    $region62: #{decoder_forward.1} parent=1 // pred_check
      _
    $region63: #{decoder_forward.1} parent=1 // pred_check_branch
      %535 = sbr.rel (0) target = $region65
    $region64: #{decoder_forward.1} parent=1 // pred_region
      _
    $region65: #{decoder_forward.1} parent=1 // pred_fallthru
      _
    // Predicated region
    $region66: #{decoder_forward.1} parent=1 // pred_check
      _
    $region67: #{decoder_forward.1} parent=1 // pred_check_branch
      %537 = sbr.rel (0) target = $region69
    $region68: #{decoder_forward.1} parent=1 // pred_region
      _
    $region69: #{decoder_forward.1} parent=1 // pred_fallthru
      _
    // Predicated region
    $region70: #{decoder_forward.1} parent=1 // pred_check
      _
    $region71: #{decoder_forward.1} parent=1 // pred_check_branch
      %539 = sbr.rel (0) target = $region73
    $region72: #{decoder_forward.1} parent=1 // pred_region
      _
    $region73: #{decoder_forward.1} parent=1 // pred_fallthru
      _
    // Predicated region
    $region74: #{decoder_forward.1} parent=1 // pred_check
      _
    $region75: #{decoder_forward.1} parent=1 // pred_check_branch
      %541 = sbr.rel (0) target = $region77
    $region76: #{decoder_forward.1} parent=1 // pred_region
      _
    $region77: #{decoder_forward.1} parent=1 // pred_fallthru
      _
    // Predicated region
    $region78: #{decoder_forward.1} parent=1 // pred_check
      _
    $region79: #{decoder_forward.1} parent=1 // pred_check_branch
      %543 = sbr.rel (0) target = $region81
    $region80: #{decoder_forward.1} parent=1 // pred_region
      _
    $region81: #{decoder_forward.1} parent=1 // pred_fallthru
      _
    // Predicated region
    $region82: #{decoder_forward.1} parent=1 // pred_check
      _
    $region83: #{decoder_forward.1} parent=1 // pred_check_branch
      %545 = sbr.rel (0) target = $region85
    $region84: #{decoder_forward.1} parent=1 // pred_region
      _
    $region85: #{decoder_forward.1} parent=1 // pred_fallthru
      _
    %546 = vsyncpa [#allocation3], 1
    %547 = vsyncpa [#allocation5], 1

</llo_original>
